<compile_context>
chip_gen: v7x
topology: tpu7x:2x2x1
jax: 0.10.0
libtpu: 0.0.40
codegen_flags: <defaults>
</compile_context>

<pallas_src>
import functools

import jax
import jax.numpy as jnp
from jax import lax
from jax.experimental import pallas as pl
from jax.experimental.pallas import tpu as pltpu


EMBED = 128  # embedding_size in the PyTorch module


def _round_up(n, m):
    return ((n + m - 1) // m) * m


def _orthogonal(key, out_dim, in_dim, gain=1.0):
    """Deterministic orthogonal init (same semantics as nn.init.orthogonal_)."""
    rows, cols = out_dim, in_dim
    flat = jax.random.normal(key, (max(rows, cols), min(rows, cols)), jnp.float32)
    q, r = jnp.linalg.qr(flat)
    d = jnp.sign(jnp.diagonal(r))  # make the decomposition unique (torch sign fix)
    q = q * d[None, :]
    if rows < cols:
        q = q.T
    return gain * q[:rows, :cols]


def init_params(key, input_dim, output_dim):
    """Build ResDynMLP params ready for the kernel.

    Weights are pre-transposed to (in, out) and stored in bf16 for the MXU;
    W3/b3 are zero lane-padded from output_dim to 128 columns. Biases are
    packed into one (3, 128) f32 buffer: row0=b1, row1=b2, row2=b3(padded).
    Returns (w1, w2, w3, b_all).
    """
    assert output_dim <= EMBED
    ks = jax.random.split(key, 6)
    w1 = _orthogonal(ks[0], EMBED, input_dim)           # torch shape (out, in)
    b1 = jax.random.uniform(ks[1], (EMBED,), jnp.float32, -0.2, 0.25)
    w2 = _orthogonal(ks[2], EMBED, EMBED)
    b2 = jax.random.uniform(ks[3], (EMBED,), jnp.float32, -0.2, 0.25)
    w3 = _orthogonal(ks[4], output_dim, EMBED)
    b3 = jax.random.uniform(ks[5], (output_dim,), jnp.float32, -0.2, 0.25)

    # transpose to (in, out), lane-pad the last projection to 128, cast to bf16
    w1_t = w1.T.astype(jnp.bfloat16)                                    # (in, 128)
    w2_t = w2.T.astype(jnp.bfloat16)                                    # (128, 128)
    w3_t = jnp.zeros((EMBED, EMBED), jnp.float32).at[:, :output_dim].set(w3.T)
    w3_t = w3_t.astype(jnp.bfloat16)                                    # (128, 128)

    b3_pad = jnp.zeros((EMBED,), jnp.float32).at[:output_dim].set(b3)
    b_all = jnp.stack([b1, b2, b3_pad], axis=0)                          # (3, 128) f32

    return (w1_t, w2_t, w3_t, b_all)


def mlp_kernel(x_ref, w1_ref, w2_ref, w3_ref, b_ref, o_ref, *, d_out, chunk):
    # Weights / biases are VMEM-resident (constant index maps); load once per tile.
    w1 = w1_ref[...]
    w2 = w2_ref[...]
    w3 = w3_ref[...]
    b1 = b_ref[0:1, :]
    b2 = b_ref[1:2, :]
    b3 = b_ref[2:3, :d_out]

    def compute(x_f32):
        x = x_f32.astype(jnp.bfloat16)                     # cast on the VPU (free)
        h1 = jnp.dot(x, w1, preferred_element_type=jnp.float32) + b1
        h1 = jnp.maximum(h1, 0.0).astype(jnp.bfloat16)     # ReLU in f32 -> bf16 for MXU
        h2 = jnp.dot(h1, w2, preferred_element_type=jnp.float32) + b2
        h2 = jnp.maximum(h2, 0.0).astype(jnp.bfloat16)
        y = jnp.dot(h2, w3, preferred_element_type=jnp.float32)
        y = y[:, :d_out] + b3                              # drop the MXU lane padding
        return jnp.tanh(y).astype(o_ref.dtype)             # tanh on the EUP, f32

    bb = x_ref.shape[0]
    if chunk is not None and chunk < bb and bb % chunk == 0:
        # Sub-chunk large tiles so intermediates stay vreg-resident
        # (v5e has a single vector-store slot per bundle).
        def body(c, carry):
            i = pl.multiple_of(c * chunk, chunk)
            o_ref[pl.ds(i, chunk), :] = compute(x_ref[pl.ds(i, chunk), :])
            return carry

        lax.fori_loop(0, bb // chunk, body, 0, unroll=True)
    else:
        o_ref[...] = compute(x_ref[...])


@functools.partial(jax.jit, static_argnames=("d_out", "block_b", "block_rows"))
def res_dyn_mlp_forward(x, params, *, d_out, block_b=2048, block_rows=256):
    """Fused ResDynMLP forward. x: (B, input_dim) f32 -> (B, d_out) f32."""
    w1, w2, w3, b_all = params
    B, d_in = x.shape

    # Batch tile: multiple of 8 (f32 sublanes), never bigger than the rounded batch.
    # Large batches get >= 2 grid steps, so "parallel" can shard across v7x's 2 TCs.
    bb = min(_round_up(block_b, 8), _round_up(B, 8))
    grid = pl.cdiv(B, bb)  # ragged last tile: Pallas masks OOB rows on writeback

    kernel = functools.partial(mlp_kernel, d_out=d_out, chunk=block_rows)

    return pl.pallas_call(
        kernel,
        out_shape=jax.ShapeDtypeStruct((B, d_out), jnp.float32),
        grid_spec=pltpu.PrefetchScalarGridSpec(
            num_scalar_prefetch=0,
            grid=(grid,),
            in_specs=[
                pl.BlockSpec((bb, d_in), lambda i: (i, 0)),      # x tile (streams, f32)
                pl.BlockSpec((d_in, EMBED), lambda i: (0, 0)),   # W1 (VMEM-resident)
                pl.BlockSpec((EMBED, EMBED), lambda i: (0, 0)),  # W2
                pl.BlockSpec((EMBED, EMBED), lambda i: (0, 0)),  # W3 (lane-padded)
                pl.BlockSpec((3, EMBED), lambda i: (0, 0)),      # packed biases
            ],
            out_specs=pl.BlockSpec((bb, d_out), lambda i: (i, 0)),  # narrow true output
        ),
        compiler_params=pltpu.CompilerParams(
            dimension_semantics=("parallel",),
        ),
    )(x, w1, w2, w3, b_all)


def res_dyn_mlp_ref(x, params, d_out):
    """Pure-JAX reference mirroring the kernel's bf16-operand / f32-accumulate path."""
    w1, w2, w3, b_all = params
    w1f, w2f, w3f = (w.astype(jnp.float32) for w in (w1, w2, w3))
    b1, b2, b3 = b_all[0:1], b_all[1:2], b_all[2:3]
    xb = x.astype(jnp.bfloat16).astype(jnp.float32)
    h1 = jnp.maximum(xb @ w1f + b1, 0.0)
    h1 = h1.astype(jnp.bfloat16).astype(jnp.float32)
    h2 = jnp.maximum(h1 @ w2f + b2, 0.0)
    h2 = h2.astype(jnp.bfloat16).astype(jnp.float32)
    y = jnp.tanh(h2 @ w3f + b3)
    return y[:, :d_out]


if __name__ == "__main__":
    key = jax.random.PRNGKey(0)
    k_x, k_x2, k_x3, k_p = jax.random.split(key, 4)

    input_dim, output_dim = 16, 8
    params = init_params(k_p, input_dim, output_dim)

    # 1) Small batch: single grid step, single-shot compute path.
    B = 8
    x = jax.random.normal(k_x, (B, input_dim), jnp.float32)
    out = jax.block_until_ready(res_dyn_mlp_forward(x, params, d_out=output_dim))
    ref = res_dyn_mlp_ref(x, params, output_dim)
    assert out.shape == (B, output_dim)
    assert jnp.allclose(out, ref, atol=2e-3, rtol=2e-3), "mismatch vs JAX reference (B=8)"

    # 2) Ragged batch: grid=2 with a partial last tile (OOB rows masked on writeback).
    B2, bb2 = 24, 16
    x2 = jax.random.normal(k_x2, (B2, input_dim), jnp.float32)
    out2 = jax.block_until_ready(
        res_dyn_mlp_forward(x2, params, d_out=output_dim, block_b=bb2))
    ref2 = res_dyn_mlp_ref(x2, params, output_dim)
    assert out2.shape == (B2, output_dim)
    assert jnp.allclose(out2, ref2, atol=2e-3, rtol=2e-3), "mismatch vs JAX reference (B=24)"

    # 3) Larger tile exercising the in-kernel sub-chunk (unrolled fori_loop) path.
    B3 = 512
    x3 = jax.random.normal(k_x3, (B3, input_dim), jnp.float32)
    out3 = jax.block_until_ready(
        res_dyn_mlp_forward(x3, params, d_out=output_dim, block_b=512, block_rows=128))
    ref3 = res_dyn_mlp_ref(x3, params, output_dim)
    assert out3.shape == (B3, output_dim)
    assert jnp.allclose(out3, ref3, atol=2e-3, rtol=2e-3), "mismatch vs JAX reference (B=512)"

    print("KERNEL_OK")
</pallas_src>

<mosaic_0001>
module attributes {stable_mosaic.version = 11 : i64} {
  func.func @mlp_kernel(%arg0: i32, %arg1: memref<8x16xf32, #tpu.memory_space<vmem>>, %arg2: memref<16x128xbf16, #tpu.memory_space<vmem>>, %arg3: memref<128x128xbf16, #tpu.memory_space<vmem>>, %arg4: memref<128x128xbf16, #tpu.memory_space<vmem>>, %arg5: memref<3x128xf32, #tpu.memory_space<vmem>>, %arg6: memref<8x8xf32, #tpu.memory_space<vmem>>) attributes {dimension_semantics = [#tpu.dimension_semantics<parallel>], iteration_bounds = array<i64: 1>, scalar_prefetch = 0 : i64, scratch_operands = 0 : i64, tpu.core_type = #tpu.core_type<tc>, window_params = [{transform_indices = @transform_0, window_bounds = array<i64: 8, 16>}, {pipeline_mode = #tpu.pipeline_mode<synchronous>, transform_indices = @transform_1, window_bounds = array<i64: 16, 128>}, {pipeline_mode = #tpu.pipeline_mode<synchronous>, transform_indices = @transform_2, window_bounds = array<i64: 128, 128>}, {pipeline_mode = #tpu.pipeline_mode<synchronous>, transform_indices = @transform_3, window_bounds = array<i64: 128, 128>}, {pipeline_mode = #tpu.pipeline_mode<synchronous>, transform_indices = @transform_4, window_bounds = array<i64: 3, 128>}, {transform_indices = @transform_5, window_bounds = array<i64: 8, 8>}]} {
    %c0 = arith.constant 0 : index
    %c0_0 = arith.constant 0 : index
    %0 = vector.load %arg2[%c0, %c0_0] : memref<16x128xbf16, #tpu.memory_space<vmem>>, vector<16x128xbf16>
    %c0_1 = arith.constant 0 : index
    %c0_2 = arith.constant 0 : index
    %1 = vector.load %arg3[%c0_1, %c0_2] : memref<128x128xbf16, #tpu.memory_space<vmem>>, vector<128x128xbf16>
    %c0_3 = arith.constant 0 : index
    %c0_4 = arith.constant 0 : index
    %2 = vector.load %arg4[%c0_3, %c0_4] : memref<128x128xbf16, #tpu.memory_space<vmem>>, vector<128x128xbf16>
    %c0_5 = arith.constant 0 : index
    %c0_6 = arith.constant 0 : index
    %3 = vector.load %arg5[%c0_5, %c0_6] : memref<3x128xf32, #tpu.memory_space<vmem>>, vector<1x128xf32>
    %c1 = arith.constant 1 : index
    %c0_7 = arith.constant 0 : index
    %4 = vector.load %arg5[%c1, %c0_7] : memref<3x128xf32, #tpu.memory_space<vmem>>, vector<1x128xf32>
    %c2 = arith.constant 2 : index
    %c0_8 = arith.constant 0 : index
    %5 = vector.load %arg5[%c2, %c0_8] : memref<3x128xf32, #tpu.memory_space<vmem>>, vector<1x8xf32>
    %c0_9 = arith.constant 0 : index
    %c0_10 = arith.constant 0 : index
    %6 = vector.load %arg1[%c0_9, %c0_10] : memref<8x16xf32, #tpu.memory_space<vmem>>, vector<8x16xf32>
    %7 = arith.truncf %6 : vector<8x16xf32> to vector<8x16xbf16>
    %cst = arith.constant dense<0.000000e+00> : vector<8x128xf32>
    %8 = tpu.matmul %7, %0, %cst {dimension_numbers = #tpu.dot_dimension_numbers<[1], [0], [0], [1], [0, 0, 1, 1], [], []>} : vector<8x16xbf16>, vector<16x128xbf16>, vector<8x128xf32> -> vector<8x128xf32>
    %9 = vector.broadcast %3 : vector<1x128xf32> to vector<8x128xf32>
    %10 = arith.addf %8, %9 : vector<8x128xf32>
    %cst_11 = arith.constant 0.000000e+00 : f32
    %11 = vector.broadcast %cst_11 : f32 to vector<8x128xf32>
    %12 = arith.maximumf %10, %11 : vector<8x128xf32>
    %13 = arith.truncf %12 : vector<8x128xf32> to vector<8x128xbf16>
    %cst_12 = arith.constant dense<0.000000e+00> : vector<8x128xf32>
    %14 = tpu.matmul %13, %1, %cst_12 {dimension_numbers = #tpu.dot_dimension_numbers<[1], [0], [0], [1], [0, 0, 1, 1], [], []>} : vector<8x128xbf16>, vector<128x128xbf16>, vector<8x128xf32> -> vector<8x128xf32>
    %15 = vector.broadcast %4 : vector<1x128xf32> to vector<8x128xf32>
    %16 = arith.addf %14, %15 : vector<8x128xf32>
    %cst_13 = arith.constant 0.000000e+00 : f32
    %17 = vector.broadcast %cst_13 : f32 to vector<8x128xf32>
    %18 = arith.maximumf %16, %17 : vector<8x128xf32>
    %19 = arith.truncf %18 : vector<8x128xf32> to vector<8x128xbf16>
    %cst_14 = arith.constant dense<0.000000e+00> : vector<8x128xf32>
    %20 = tpu.matmul %19, %2, %cst_14 {dimension_numbers = #tpu.dot_dimension_numbers<[1], [0], [0], [1], [0, 0, 1, 1], [], []>} : vector<8x128xbf16>, vector<128x128xbf16>, vector<8x128xf32> -> vector<8x128xf32>
    %21 = vector.extract_strided_slice %20 {offsets = [0, 0], sizes = [8, 8], strides = [1, 1]} : vector<8x128xf32> to vector<8x8xf32>
    %22 = vector.broadcast %5 : vector<1x8xf32> to vector<8x8xf32>
    %23 = arith.addf %21, %22 : vector<8x8xf32>
    %24 = math.tanh %23 : vector<8x8xf32>
    %c0_15 = arith.constant 0 : index
    %c0_16 = arith.constant 0 : index
    %25 = vector.load %arg6[%c0_15, %c0_16] : memref<8x8xf32, #tpu.memory_space<vmem>>, vector<8x8xf32>
    tpu.vector_store %arg6[%c0_15, %c0_16], %24 {strides = array<i32>} : memref<8x8xf32, #tpu.memory_space<vmem>>, vector<8x8xf32>,
    return
  }
  func.func @transform_0(%arg0: i32) -> (i32, i32) {
    %c0_i32 = arith.constant 0 : i32
    %c0_i32_0 = arith.constant 0 : i32
    return %arg0, %c0_i32 : i32, i32
  }
  func.func @transform_1(%arg0: i32) -> (i32, i32) {
    %c0_i32 = arith.constant 0 : i32
    %c0_i32_0 = arith.constant 0 : i32
    %c0_i32_1 = arith.constant 0 : i32
    return %c0_i32, %c0_i32_0 : i32, i32
  }
  func.func @transform_2(%arg0: i32) -> (i32, i32) {
    %c0_i32 = arith.constant 0 : i32
    %c0_i32_0 = arith.constant 0 : i32
    %c0_i32_1 = arith.constant 0 : i32
    return %c0_i32, %c0_i32_0 : i32, i32
  }
  func.func @transform_3(%arg0: i32) -> (i32, i32) {
    %c0_i32 = arith.constant 0 : i32
    %c0_i32_0 = arith.constant 0 : i32
    %c0_i32_1 = arith.constant 0 : i32
    return %c0_i32, %c0_i32_0 : i32, i32
  }
  func.func @transform_4(%arg0: i32) -> (i32, i32) {
    %c0_i32 = arith.constant 0 : i32
    %c0_i32_0 = arith.constant 0 : i32
    %c0_i32_1 = arith.constant 0 : i32
    return %c0_i32, %c0_i32_0 : i32, i32
  }
  func.func @transform_5(%arg0: i32) -> (i32, i32) {
    %c0_i32 = arith.constant 0 : i32
    %c0_i32_0 = arith.constant 0 : i32
    return %arg0, %c0_i32 : i32, i32
  }
}

</mosaic_0001>

<llo_original>
// kernel: res_dyn_mlp_forward.1
$region0: #{res_dyn_mlp_forward.1}
  #allocation0 [shape = 'u32[]', space=smem, size = 0x4, offset = 0x4, fixed_abs, tag = 'smem constant byte address 0x4 - core index']
  #allocation1 [shape = 'u32[144,128]{1,0:T(1,128)}', space=vmem, size = 0x12000, scoped, tag = 'internal scratch']
  %s0 = inlined_call_operand.hbm [shape: f32[8,16], index: 0, kind: input, shape index: {}]
  %s1 = inlined_call_operand.hbm [shape: bf16[16,128], index: 1, kind: input, shape index: {}]
  %s2 = inlined_call_operand.hbm [shape: bf16[128,128], index: 2, kind: input, shape index: {}]
  %s3 = inlined_call_operand.hbm [shape: bf16[128,128], index: 3, kind: input, shape index: {}]
  %s4 = inlined_call_operand.vmem [shape: f32[3,128], index: 4, kind: input, shape index: {}]
  %s5 = inlined_call_operand.hbm [shape: f32[8,8], index: 5, kind: output, shape index: {}]
  %s6 = sld [smem:[#allocation0]]
  $region46: #{res_dyn_mlp_forward.1} parent=0
    _
  %s8 = ssub.s32 1, %s6
  %s9 = scalar_select 0, %s8, %s6
  $region1: #{res_dyn_mlp_forward.1} parent=0
    #allocation2 [shape = 'u8[4096]{0}', space=vmem, size = 0x1000, scoped, tag = 'input window, operand 0, single buffered']
    #allocation3 [shape = 's32[1]{0}', space=sflag, size = 0x4, scoped, tag = 'scoped memory for res_dyn_mlp_forward.1']
    #allocation4 [shape = 's32[1]{0}', space=sflag, size = 0x4, scoped, tag = 'scoped memory for res_dyn_mlp_forward.1']
    #allocation5 [shape = 'u8[4096]{0}', space=vmem, size = 0x1000, scoped, tag = 'input window, operand 1, single buffered']
    #allocation6 [shape = 's32[1]{0}', space=sflag, size = 0x4, scoped, tag = 'scoped memory for res_dyn_mlp_forward.1']
    #allocation7 [shape = 'u8[32768]{0}', space=vmem, size = 0x8000, scoped, tag = 'input window, operand 2, single buffered']
    #allocation8 [shape = 'u8[32768]{0}', space=vmem, size = 0x8000, scoped, tag = 'input window, operand 3, single buffered']
    #allocation9 [shape = 's32[1]{0}', space=sflag, size = 0x4, scoped, tag = 'scoped memory for res_dyn_mlp_forward.1']
    #allocation10 [shape = 'u8[4096]{0}', space=vmem, size = 0x1000, scoped, tag = 'output window, operand 0, single buffered']
    %10 = vsyncpa [#allocation3], 0
    %11 = vsyncpa [#allocation6], 0
    %12 = vsyncpa [#allocation9], 0
    %13 = vsyncpa [#allocation4], 0
    // Predicated region
    $region2: #{res_dyn_mlp_forward.1} parent=1 // pred_check
      _
    $region3: #{res_dyn_mlp_forward.1} parent=1 // pred_check_branch
      %15 = sbr.rel (0) target = $region5
    $region4: #{res_dyn_mlp_forward.1} parent=1 // pred_region
      %s17 = ssub.s32 128, 128
      %18 = vsyncadd [#allocation3], %s17
      %s20 = sshll.u32 [#allocation2], 4
      %s21 = int_to_ptr.vmem [resolvable:$true] %s20
      %23 = dma.hbm_to_vmem [thread:$0]  %s0, 128, %s21, [#allocation3]
    $region5: #{res_dyn_mlp_forward.1} parent=1 // pred_fallthru
      _
    // Predicated region
    $region6: #{res_dyn_mlp_forward.1} parent=1 // pred_check
      _
    $region7: #{res_dyn_mlp_forward.1} parent=1 // pred_check_branch
      %25 = sbr.rel (0) target = $region9
    $region8: #{res_dyn_mlp_forward.1} parent=1 // pred_region
      %s27 = ssub.s32 128, 128
      %28 = vsyncadd [#allocation6], %s27
      %s29 = sshll.u32 [#allocation5], 4
      %s30 = int_to_ptr.vmem [resolvable:$true] %s29
      %35 = dma.hbm_to_vmem [thread:$0]  %s1, 128, %s30, [#allocation6], 64, 64, 4
    $region9: #{res_dyn_mlp_forward.1} parent=1 // pred_fallthru
      _
    // Predicated region
    $region10: #{res_dyn_mlp_forward.1} parent=1 // pred_check
      _
    $region11: #{res_dyn_mlp_forward.1} parent=1 // pred_check_branch
      %37 = sbr.rel (0) target = $region13
    $region12: #{res_dyn_mlp_forward.1} parent=1 // pred_region
      %s39 = ssub.s32 1024, 1024
      %40 = vsyncadd [#allocation6], %s39
      %s41 = sshll.u32 [#allocation7], 4
      %s42 = int_to_ptr.vmem [resolvable:$true] %s41
      %47 = dma.hbm_to_vmem [thread:$0]  %s2, 1024, %s42, [#allocation6], 64, 64, 4
    $region13: #{res_dyn_mlp_forward.1} parent=1 // pred_fallthru
      _
    // Predicated region
    $region14: #{res_dyn_mlp_forward.1} parent=1 // pred_check
      _
    $region15: #{res_dyn_mlp_forward.1} parent=1 // pred_check_branch
      %49 = sbr.rel (0) target = $region17
    $region16: #{res_dyn_mlp_forward.1} parent=1 // pred_region
      %s51 = ssub.s32 1024, 1024
      %52 = vsyncadd [#allocation9], %s51
      %s53 = sshll.u32 [#allocation8], 4
      %s54 = int_to_ptr.vmem [resolvable:$true] %s53
      %59 = dma.hbm_to_vmem [thread:$0]  %s3, 1024, %s54, [#allocation9], 64, 64, 4
    $region17: #{res_dyn_mlp_forward.1} parent=1 // pred_fallthru
      _
    // Predicated region
    $region18: #{res_dyn_mlp_forward.1} parent=1 // pred_check
      _
    $region19: #{res_dyn_mlp_forward.1} parent=1 // pred_check_branch
      %61 = sbr.rel (0) target = $region21
    $region20: #{res_dyn_mlp_forward.1} parent=1 // pred_region
      _
    $region21: #{res_dyn_mlp_forward.1} parent=1 // pred_fallthru
      _
    // Predicated region
    $region22: #{res_dyn_mlp_forward.1} parent=1 // pred_check
      _
    $region23: #{res_dyn_mlp_forward.1} parent=1 // pred_check_branch
      %63 = sbr.rel (0) target = $region25
    $region24: #{res_dyn_mlp_forward.1} parent=1 // pred_region
      %64 = dma.done [#allocation3], 128
    $region25: #{res_dyn_mlp_forward.1} parent=1 // pred_fallthru
      _
    // Predicated region
    $region26: #{res_dyn_mlp_forward.1} parent=1 // pred_check
      _
    $region27: #{res_dyn_mlp_forward.1} parent=1 // pred_check_branch
      %66 = sbr.rel (0) target = $region29
    $region28: #{res_dyn_mlp_forward.1} parent=1 // pred_region
      %67 = dma.done [#allocation6], 128
    $region29: #{res_dyn_mlp_forward.1} parent=1 // pred_fallthru
      _
    // Predicated region
    $region30: #{res_dyn_mlp_forward.1} parent=1 // pred_check
      _
    $region31: #{res_dyn_mlp_forward.1} parent=1 // pred_check_branch
      %69 = sbr.rel (0) target = $region33
    $region32: #{res_dyn_mlp_forward.1} parent=1 // pred_region
      %70 = dma.done [#allocation6], 1024
    $region33: #{res_dyn_mlp_forward.1} parent=1 // pred_fallthru
      _
    // Predicated region
    $region34: #{res_dyn_mlp_forward.1} parent=1 // pred_check
      _
    $region35: #{res_dyn_mlp_forward.1} parent=1 // pred_check_branch
      %72 = sbr.rel (0) target = $region37
    $region36: #{res_dyn_mlp_forward.1} parent=1 // pred_region
      %73 = dma.done [#allocation9], 1024
    $region37: #{res_dyn_mlp_forward.1} parent=1 // pred_fallthru
      _
    %v75 = vld [vmem:[#allocation5] sm:$0xf]
    %v76 = vld [vmem:[#allocation5 + $0x4] sm:$0xf]
    %v77 = vld [vmem:[#allocation7] sm:$0xf]
    %v78 = vld [vmem:[#allocation7 + $0x4] sm:$0xf]
    %v79 = vld [vmem:[#allocation7 + $0x8] sm:$0xf]
    %v80 = vld [vmem:[#allocation7 + $0xc] sm:$0xf]
    %v81 = vld [vmem:[#allocation7 + $0x10] sm:$0xf]
    %v82 = vld [vmem:[#allocation7 + $0x14] sm:$0xf]
    %v83 = vld [vmem:[#allocation7 + $0x18] sm:$0xf]
    %v84 = vld [vmem:[#allocation7 + $0x1c] sm:$0xf]
    %v85 = vld [vmem:[#allocation7 + $0x20] sm:$0xf]
    %v86 = vld [vmem:[#allocation7 + $0x24] sm:$0xf]
    %v87 = vld [vmem:[#allocation7 + $0x28] sm:$0xf]
    %v88 = vld [vmem:[#allocation7 + $0x2c] sm:$0xf]
    %v89 = vld [vmem:[#allocation7 + $0x30] sm:$0xf]
    %v90 = vld [vmem:[#allocation7 + $0x34] sm:$0xf]
    %v91 = vld [vmem:[#allocation7 + $0x38] sm:$0xf]
    %v92 = vld [vmem:[#allocation7 + $0x3c] sm:$0xf]
    %v93 = vld [vmem:[#allocation8] sm:$0xf]
    %v94 = vld [vmem:[#allocation8 + $0x4] sm:$0xf]
    %v95 = vld [vmem:[#allocation8 + $0x8] sm:$0xf]
    %v96 = vld [vmem:[#allocation8 + $0xc] sm:$0xf]
    %v97 = vld [vmem:[#allocation8 + $0x10] sm:$0xf]
    %v98 = vld [vmem:[#allocation8 + $0x14] sm:$0xf]
    %v99 = vld [vmem:[#allocation8 + $0x18] sm:$0xf]
    %v100 = vld [vmem:[#allocation8 + $0x1c] sm:$0xf]
    %v101 = vld [vmem:[#allocation8 + $0x20] sm:$0xf]
    %v102 = vld [vmem:[#allocation8 + $0x24] sm:$0xf]
    %v103 = vld [vmem:[#allocation8 + $0x28] sm:$0xf]
    %v104 = vld [vmem:[#allocation8 + $0x2c] sm:$0xf]
    %v105 = vld [vmem:[#allocation8 + $0x30] sm:$0xf]
    %v106 = vld [vmem:[#allocation8 + $0x34] sm:$0xf]
    %v107 = vld [vmem:[#allocation8 + $0x38] sm:$0xf]
    %v108 = vld [vmem:[#allocation8 + $0x3c] sm:$0xf]
    %v109 = vld [vmem:[%s4] sm:$0x1]
    %v110 = vld [vmem:[%s4 + $0x1] sm:$0x1]
    %v111 = vld [vmem:[%s4 + $0x2] sm:$0x1]
    %v112 = vld [vmem:[#allocation2] sm:$0xff]
    %v113 = vpack.c.bf16 %v112, %v112
    %v114 = vlaneseq
    %v115 = vshrl.u32 %v114, 7
    %v116 = vsub.s32 0, %v115
    %v117 = vrot.slane %v109, %v116
    %v120 = vunpack.c.l.b16 %v75
    %v121 = vunpack.c.l.b16 %v76
    %v122 = vpack.c.b16 %v121, %v120
    %vm124 = vcmask 130048
    %v126 = vsel %vm124, %v113, 0
    %128 = vmatprep.subr.bf16.mxu0 0
    %129 = vmatpush1.bf16.msra.mxu0 %v122
    %130 = vmatprep.subr.bf16.mxu0 0
    %131 = vmatpush1.bf16.msra.mxu0 0
    %132 = vmatprep.subr.bf16.mxu0 0
    %133 = vmatpush1.bf16.msra.mxu0 0
    %134 = vmatprep.subr.bf16.mxu0 0
    %135 = vmatpush1.bf16.msra.mxu0 0
    %136 = vmatprep.subr.bf16.mxu0 0
    %137 = vmatpush1.bf16.msra.mxu0 0
    %138 = vmatprep.subr.bf16.mxu0 0
    %139 = vmatpush1.bf16.msra.mxu0 0
    %140 = vmatprep.subr.bf16.mxu0 0
    %141 = vmatpush1.bf16.msra.mxu0 0
    %142 = vmatprep.subr.bf16.mxu0 0
    %143 = vmatpush1.bf16.msra.mxu0 0
    %144 = vmatprep.subr.bf16.mxu0 0
    %145 = vmatpush1.bf16.msra.mxu0 0
    %146 = vmatprep.subr.bf16.mxu0 0
    %147 = vmatpush1.bf16.msra.mxu0 0
    %148 = vmatprep.subr.bf16.mxu0 0
    %149 = vmatpush1.bf16.msra.mxu0 0
    %150 = vmatprep.subr.bf16.mxu0 0
    %151 = vmatpush1.bf16.msra.mxu0 0
    %152 = vmatprep.subr.bf16.mxu0 0
    %153 = vmatpush1.bf16.msra.mxu0 0
    %154 = vmatprep.subr.bf16.mxu0 0
    %155 = vmatpush1.bf16.msra.mxu0 0
    %156 = vmatprep.subr.bf16.mxu0 0
    %157 = vmatpush1.bf16.msra.mxu0 0
    %158 = vmatprep.subr.bf16.mxu0 0
    %159 = vmatpush1.bf16.msra.mxu0 0
    %160 = vmatprep.mubr.bf16.mxu0 0
    %161 = vmatmul.mubr.bf16.gmra.mrb[0].mxu0 %v126
    %v162 = vpop.f32.mrb[0].mxu0
    %v163 = vadd.f32 %v117, %v162
    %v164 = vpop.f32.mrb[0].mxu0
    %v165 = vpop.f32.mrb[0].mxu0
    %v166 = vpop.f32.mrb[0].mxu0
    %167 = vdwg.mxu0
    %v168 = vmax.f32 %v163, 0.0
    %v169 = vpack.c.bf16 %v168, %v168
    %v170 = vlaneseq
    %v171 = vshrl.u32 %v170, 7
    %v172 = vsub.s32 0, %v171
    %v173 = vrot.slane %v110, %v172
    %v190 = vunpack.c.l.b16 %v77
    %v191 = vunpack.c.l.b16 %v78
    %v192 = vunpack.c.l.b16 %v79
    %v193 = vunpack.c.l.b16 %v80
    %v194 = vunpack.c.l.b16 %v81
    %v195 = vunpack.c.l.b16 %v82
    %v196 = vunpack.c.l.b16 %v83
    %v197 = vunpack.c.l.b16 %v84
    %v198 = vunpack.c.l.b16 %v85
    %v199 = vunpack.c.l.b16 %v86
    %v200 = vunpack.c.l.b16 %v87
    %v201 = vunpack.c.l.b16 %v88
    %v202 = vunpack.c.l.b16 %v89
    %v203 = vunpack.c.l.b16 %v90
    %v204 = vunpack.c.l.b16 %v91
    %v205 = vunpack.c.l.b16 %v92
    %v206 = vpack.c.b16 %v191, %v190
    %v207 = vpack.c.b16 %v193, %v192
    %v208 = vpack.c.b16 %v195, %v194
    %v209 = vpack.c.b16 %v197, %v196
    %v210 = vpack.c.b16 %v199, %v198
    %v211 = vpack.c.b16 %v201, %v200
    %v212 = vpack.c.b16 %v203, %v202
    %v213 = vpack.c.b16 %v205, %v204
    %222 = vmatprep.subr.bf16.mxu0 0
    %223 = vmatpush1.bf16.msra.mxu0 %v206
    %224 = vmatprep.subr.bf16.mxu0 0
    %225 = vmatpush1.bf16.msra.mxu0 %v207
    %226 = vmatprep.subr.bf16.mxu0 0
    %227 = vmatpush1.bf16.msra.mxu0 %v208
    %228 = vmatprep.subr.bf16.mxu0 0
    %229 = vmatpush1.bf16.msra.mxu0 %v209
    %230 = vmatprep.subr.bf16.mxu0 0
    %231 = vmatpush1.bf16.msra.mxu0 %v210
    %232 = vmatprep.subr.bf16.mxu0 0
    %233 = vmatpush1.bf16.msra.mxu0 %v211
    %234 = vmatprep.subr.bf16.mxu0 0
    %235 = vmatpush1.bf16.msra.mxu0 %v212
    %236 = vmatprep.subr.bf16.mxu0 0
    %237 = vmatpush1.bf16.msra.mxu0 %v213
    %238 = vmatprep.subr.bf16.mxu0 0
    %239 = vmatpush1.bf16.msra.mxu0 0
    %240 = vmatprep.subr.bf16.mxu0 0
    %241 = vmatpush1.bf16.msra.mxu0 0
    %242 = vmatprep.subr.bf16.mxu0 0
    %243 = vmatpush1.bf16.msra.mxu0 0
    %244 = vmatprep.subr.bf16.mxu0 0
    %245 = vmatpush1.bf16.msra.mxu0 0
    %246 = vmatprep.subr.bf16.mxu0 0
    %247 = vmatpush1.bf16.msra.mxu0 0
    %248 = vmatprep.subr.bf16.mxu0 0
    %249 = vmatpush1.bf16.msra.mxu0 0
    %250 = vmatprep.subr.bf16.mxu0 0
    %251 = vmatpush1.bf16.msra.mxu0 0
    %252 = vmatprep.subr.bf16.mxu0 0
    %253 = vmatpush1.bf16.msra.mxu0 0
    %254 = vmatprep.mubr.bf16.mxu0 0
    %255 = vmatmul.mubr.bf16.gmra.mrb[0].mxu0 %v169
    %v256 = vpop.f32.mrb[0].mxu0
    %v257 = vadd.f32 %v173, %v256
    %v258 = vpop.f32.mrb[0].mxu0
    %v259 = vpop.f32.mrb[0].mxu0
    %v260 = vpop.f32.mrb[0].mxu0
    %261 = vdwg.mxu0
    %v262 = vmax.f32 %v257, 0.0
    %v263 = vpack.c.bf16 %v262, %v262
    %v280 = vunpack.c.l.b16 %v93
    %v281 = vunpack.c.l.b16 %v94
    %v282 = vunpack.c.l.b16 %v95
    %v283 = vunpack.c.l.b16 %v96
    %v284 = vunpack.c.l.b16 %v97
    %v285 = vunpack.c.l.b16 %v98
    %v286 = vunpack.c.l.b16 %v99
    %v287 = vunpack.c.l.b16 %v100
    %v288 = vunpack.c.l.b16 %v101
    %v289 = vunpack.c.l.b16 %v102
    %v290 = vunpack.c.l.b16 %v103
    %v291 = vunpack.c.l.b16 %v104
    %v292 = vunpack.c.l.b16 %v105
    %v293 = vunpack.c.l.b16 %v106
    %v294 = vunpack.c.l.b16 %v107
    %v295 = vunpack.c.l.b16 %v108
    %v296 = vpack.c.b16 %v281, %v280
    %v297 = vpack.c.b16 %v283, %v282
    %v298 = vpack.c.b16 %v285, %v284
    %v299 = vpack.c.b16 %v287, %v286
    %v300 = vpack.c.b16 %v289, %v288
    %v301 = vpack.c.b16 %v291, %v290
    %v302 = vpack.c.b16 %v293, %v292
    %v303 = vpack.c.b16 %v295, %v294
    %312 = vmatprep.subr.bf16.mxu0 0
    %313 = vmatpush1.bf16.msra.mxu0 %v296
    %314 = vmatprep.subr.bf16.mxu0 0
    %315 = vmatpush1.bf16.msra.mxu0 %v297
    %316 = vmatprep.subr.bf16.mxu0 0
    %317 = vmatpush1.bf16.msra.mxu0 %v298
    %318 = vmatprep.subr.bf16.mxu0 0
    %319 = vmatpush1.bf16.msra.mxu0 %v299
    %320 = vmatprep.subr.bf16.mxu0 0
    %321 = vmatpush1.bf16.msra.mxu0 %v300
    %322 = vmatprep.subr.bf16.mxu0 0
    %323 = vmatpush1.bf16.msra.mxu0 %v301
    %324 = vmatprep.subr.bf16.mxu0 0
    %325 = vmatpush1.bf16.msra.mxu0 %v302
    %326 = vmatprep.subr.bf16.mxu0 0
    %327 = vmatpush1.bf16.msra.mxu0 %v303
    %328 = vmatprep.subr.bf16.mxu0 0
    %329 = vmatpush1.bf16.msra.mxu0 0
    %330 = vmatprep.subr.bf16.mxu0 0
    %331 = vmatpush1.bf16.msra.mxu0 0
    %332 = vmatprep.subr.bf16.mxu0 0
    %333 = vmatpush1.bf16.msra.mxu0 0
    %334 = vmatprep.subr.bf16.mxu0 0
    %335 = vmatpush1.bf16.msra.mxu0 0
    %336 = vmatprep.subr.bf16.mxu0 0
    %337 = vmatpush1.bf16.msra.mxu0 0
    %338 = vmatprep.subr.bf16.mxu0 0
    %339 = vmatpush1.bf16.msra.mxu0 0
    %340 = vmatprep.subr.bf16.mxu0 0
    %341 = vmatpush1.bf16.msra.mxu0 0
    %342 = vmatprep.subr.bf16.mxu0 0
    %343 = vmatpush1.bf16.msra.mxu0 0
    %344 = vmatprep.mubr.bf16.mxu0 0
    %345 = vmatmul.mubr.bf16.gmra.mrb[0].mxu0 %v263
    %v346 = vpop.f32.mrb[0].mxu0
    %v347 = vadd.f32 0.0, %v346
    %v348 = vpop.f32.mrb[0].mxu0
    %v349 = vpop.f32.mrb[0].mxu0
    %v350 = vpop.f32.mrb[0].mxu0
    %351 = vdwg.mxu0
    %v352 = vlaneseq
    %v353 = vshrl.u32 %v352, 7
    %v354 = vsub.s32 0, %v353
    %v355 = vrot.slane %v111, %v354
    %v356 = vadd.f32 %v347, %v355
    %v357 = vtanh.pop %v356
    %vm358 = vcmask 64512
    %359 = vst.msk [vmem:[#allocation10] sm:$0xff] %vm358, %v357
    // Predicated region
    $region38: #{res_dyn_mlp_forward.1} parent=1 // pred_check
      _
    $region39: #{res_dyn_mlp_forward.1} parent=1 // pred_check_branch
      %361 = sbr.rel (0) target = $region41
    $region40: #{res_dyn_mlp_forward.1} parent=1 // pred_region
      %s363 = ssub.s32 128, 128
      %364 = vsyncadd [#allocation4], %s363
      %s366 = sshll.u32 [#allocation10], 4
      %s367 = int_to_ptr.vmem [resolvable:$true] %s366
      %369 = dma.vmem_to_hbm [thread:$0]  %s367, 128, %s5, [#allocation4]
    $region41: #{res_dyn_mlp_forward.1} parent=1 // pred_fallthru
      _
    // Predicated region
    $region42: #{res_dyn_mlp_forward.1} parent=1 // pred_check
      _
    $region43: #{res_dyn_mlp_forward.1} parent=1 // pred_check_branch
      %371 = sbr.rel (0) target = $region45
    $region44: #{res_dyn_mlp_forward.1} parent=1 // pred_region
      %372 = dma.done [#allocation4], 128
    $region45: #{res_dyn_mlp_forward.1} parent=1 // pred_fallthru
      _
    %373 = vsyncpa [#allocation3], 1
    %374 = vsyncpa [#allocation6], 1
    %375 = vsyncpa [#allocation9], 1
    %376 = vsyncpa [#allocation4], 1

</llo_original>
